<compile_context>
chip_gen: v7x
topology: tpu7x:2x2x1
jax: 0.10.0
libtpu: 0.0.40
codegen_flags: <defaults>
</compile_context>

<pallas_src>
import numpy as np
import jax
import jax.numpy as jnp
from jax.experimental import pallas as pl
from jax.experimental.pallas import tpu as pltpu

TSL_SIGMA = 0.02        # translation noise std
POSE_SIGMA = 0.2        # relative-pose noise std (cols 3:48)
ROOT_ROT_SIGMA = 0.004  # root-rotation noise std (cols 0:3)

_POSE_DIM = 48
_TSL_DIM = 3
_NOISE_DIM = _POSE_DIM + _TSL_DIM   # 51
_SUBLANES = 8
_MAX_TB = 1024          # max block rows (VMEM use is trivial: ~0.4 KiB/row)


def _cdiv(a: int, b: int) -> int:
    return (a + b - 1) // b


def _round_up(x: int, m: int) -> int:
    return _cdiv(x, m) * m


def _tiling(B: int):
    """Pick (tb, b_pad, grid) minimizing padding; >=2 blocks when B >= 16."""
    min_blocks = 2 if B >= 16 else 1           # lets v7x split across its 2 TCs
    n_blocks = max(min_blocks, _cdiv(B, _MAX_TB))
    tb = _round_up(_cdiv(B, n_blocks), _SUBLANES)
    b_pad = _round_up(B, tb)
    return tb, b_pad, (b_pad // tb,)


def _disturb_kernel(pose_ref, tsl_ref, noise_ref, pose_out_ref, tsl_out_ref):
    # Per-column sigma for the pose block, built from scalars (no array consts).
    col = jax.lax.broadcasted_iota(jnp.int32, pose_ref.shape, 1)        # (tb, 48)
    sigma_pose = jnp.where(col < 3, ROOT_ROT_SIGMA, POSE_SIGMA).astype(jnp.float32)

    noise = noise_ref[...]                                               # (tb, 51) f32
    pose = pose_ref[...].astype(jnp.float32)
    tsl = tsl_ref[...].astype(jnp.float32)

    pose_out_ref[...] = (pose + noise[:, :_POSE_DIM] * sigma_pose
                         ).astype(pose_out_ref.dtype)
    tsl_out_ref[...] = (tsl + noise[:, _POSE_DIM:_NOISE_DIM] * TSL_SIGMA
                        ).astype(tsl_out_ref.dtype)


def pose_disturber(hand_pose, hand_transl, key):
    """Pallas equivalent of PoseDisturber.forward.

    Args:
      hand_pose:   (B, 48) float array.
      hand_transl: (B, 3)  float array.
      key:         jax PRNG key (vary per call to mimic torch's advancing RNG).

    Returns:
      (hand_pose_noisy, hand_transl_noisy) with the same shapes/dtypes.
    """
    B, P = hand_pose.shape
    assert P == _POSE_DIM, "hand_pose must have 48 columns (3 root + 15*3 rel)"
    assert hand_transl.shape == (B, _TSL_DIM)
    dtype = hand_pose.dtype

    tb, b_pad, grid = _tiling(B)

    # One standard-normal draw covering only the 51 useful columns.
    noise = jax.random.normal(key, (b_pad, _NOISE_DIM), dtype=jnp.float32)

    if b_pad != B:
        pose_in = jnp.pad(hand_pose, ((0, b_pad - B), (0, 0)))
        tsl_in = jnp.pad(hand_transl, ((0, b_pad - B), (0, 0)))
    else:
        pose_in, tsl_in = hand_pose, hand_transl

    pose_out, tsl_out = pl.pallas_call(
        _disturb_kernel,
        out_shape=(jax.ShapeDtypeStruct((b_pad, _POSE_DIM), dtype),
                   jax.ShapeDtypeStruct((b_pad, _TSL_DIM), dtype)),
        grid=grid,
        in_specs=[
            pl.BlockSpec((tb, _POSE_DIM), lambda i: (i, 0)),   # pose
            pl.BlockSpec((tb, _TSL_DIM), lambda i: (i, 0)),    # transl
            pl.BlockSpec((tb, _NOISE_DIM), lambda i: (i, 0)),  # noise
        ],
        out_specs=(
            pl.BlockSpec((tb, _POSE_DIM), lambda i: (i, 0)),
            pl.BlockSpec((tb, _TSL_DIM), lambda i: (i, 0)),
        ),
        compiler_params=pltpu.CompilerParams(
            dimension_semantics=("parallel",)),
    )(pose_in, tsl_in, noise)

    if b_pad != B:
        pose_out = pose_out[:B]
        tsl_out = tsl_out[:B]
    return pose_out, tsl_out


def _pose_disturber_ref(hand_pose, hand_transl, key):
    """Pure-JAX reference replicating the wrapper's exact noise layout."""
    B = hand_pose.shape[0]
    _, b_pad, _ = _tiling(B)
    noise = jax.random.normal(key, (b_pad, _NOISE_DIM), dtype=jnp.float32)
    col = np.arange(_POSE_DIM)
    sigma_pose = np.where(col < 3, ROOT_ROT_SIGMA, POSE_SIGMA).astype(np.float32)
    pose = (hand_pose.astype(jnp.float32)
            + noise[:B, :_POSE_DIM] * sigma_pose).astype(hand_pose.dtype)
    transl = (hand_transl.astype(jnp.float32)
              + noise[:B, _POSE_DIM:_NOISE_DIM] * TSL_SIGMA).astype(hand_transl.dtype)
    return pose, transl


def _check(B, key_data, key_noise):
    k_pose, k_transl = jax.random.split(key_data)
    hand_pose = jax.random.normal(k_pose, (B, _POSE_DIM), dtype=jnp.float32)
    hand_transl = jax.random.normal(k_transl, (B, _TSL_DIM), dtype=jnp.float32)

    pose_out, transl_out = pose_disturber(hand_pose, hand_transl, key_noise)
    pose_out = jax.block_until_ready(pose_out)
    transl_out = jax.block_until_ready(transl_out)

    assert pose_out.shape == (B, _POSE_DIM) and transl_out.shape == (B, _TSL_DIM)
    assert bool(jnp.all(jnp.isfinite(pose_out)))
    assert bool(jnp.all(jnp.isfinite(transl_out)))

    ref_pose, ref_transl = _pose_disturber_ref(hand_pose, hand_transl, key_noise)
    np.testing.assert_allclose(np.asarray(pose_out), np.asarray(ref_pose),
                               rtol=1e-6, atol=1e-6)
    np.testing.assert_allclose(np.asarray(transl_out), np.asarray(ref_transl),
                               rtol=1e-6, atol=1e-6)

    # Sanity: root-rot noise (sigma=0.004) is tiny.
    root_delta = float(jnp.max(jnp.abs(pose_out[:, :3] - hand_pose[:, :3])))
    assert root_delta < 0.1  # ~25 sigma bound


if __name__ == "__main__":
    root = jax.random.PRNGKey(0)
    k_data1, k_noise1, k_data2, k_noise2 = jax.random.split(root, 4)

    _check(B=2, key_data=k_data1, key_noise=k_noise1)    # tiny batch, grid=(1,)
    _check(B=20, key_data=k_data2, key_noise=k_noise2)   # padding + grid=(2,) path

    print("KERNEL_OK")
</pallas_src>

<mosaic_0001>
module attributes {stable_mosaic.version = 11 : i64} {
  func.func @_disturb_kernel(%arg0: i32, %arg1: memref<8x48xf32, #tpu.memory_space<vmem>>, %arg2: memref<8x3xf32, #tpu.memory_space<vmem>>, %arg3: memref<8x51xf32, #tpu.memory_space<vmem>>, %arg4: memref<8x48xf32, #tpu.memory_space<vmem>>, %arg5: memref<8x3xf32, #tpu.memory_space<vmem>>) attributes {dimension_semantics = [#tpu.dimension_semantics<parallel>], iteration_bounds = array<i64: 1>, scalar_prefetch = 0 : i64, scratch_operands = 0 : i64, tpu.core_type = #tpu.core_type<tc>, window_params = [{transform_indices = @transform_0, window_bounds = array<i64: 8, 48>}, {transform_indices = @transform_1, window_bounds = array<i64: 8, 3>}, {transform_indices = @transform_2, window_bounds = array<i64: 8, 51>}, {transform_indices = @transform_3, window_bounds = array<i64: 8, 48>}, {transform_indices = @transform_4, window_bounds = array<i64: 8, 3>}]} {
    %0 = tpu.iota {dimensions = array<i32: 1>} : vector<8x48xi32>
    %c3_i32 = arith.constant 3 : i32
    %1 = vector.broadcast %c3_i32 : i32 to vector<8x48xi32>
    %2 = arith.cmpi slt, %0, %1 : vector<8x48xi32>
    %cst = arith.constant 4.000000e-03 : f32
    %cst_0 = arith.constant 2.000000e-01 : f32
    %3 = vector.broadcast %cst : f32 to vector<8x48xf32>
    %4 = vector.broadcast %cst_0 : f32 to vector<8x48xf32>
    %5 = arith.select %2, %3, %4 : vector<8x48xi1>, vector<8x48xf32>
    %c0 = arith.constant 0 : index
    %c0_1 = arith.constant 0 : index
    %6 = vector.load %arg3[%c0, %c0_1] : memref<8x51xf32, #tpu.memory_space<vmem>>, vector<8x51xf32>
    %c0_2 = arith.constant 0 : index
    %c0_3 = arith.constant 0 : index
    %7 = vector.load %arg1[%c0_2, %c0_3] : memref<8x48xf32, #tpu.memory_space<vmem>>, vector<8x48xf32>
    %c0_4 = arith.constant 0 : index
    %c0_5 = arith.constant 0 : index
    %8 = vector.load %arg2[%c0_4, %c0_5] : memref<8x3xf32, #tpu.memory_space<vmem>>, vector<8x3xf32>
    %9 = vector.extract_strided_slice %6 {offsets = [0, 0], sizes = [8, 48], strides = [1, 1]} : vector<8x51xf32> to vector<8x48xf32>
    %10 = arith.mulf %9, %5 : vector<8x48xf32>
    %11 = arith.addf %7, %10 : vector<8x48xf32>
    %c0_6 = arith.constant 0 : index
    %c0_7 = arith.constant 0 : index
    %12 = vector.load %arg4[%c0_6, %c0_7] : memref<8x48xf32, #tpu.memory_space<vmem>>, vector<8x48xf32>
    tpu.vector_store %arg4[%c0_6, %c0_7], %11 {strides = array<i32>} : memref<8x48xf32, #tpu.memory_space<vmem>>, vector<8x48xf32>,
    %13 = vector.extract_strided_slice %6 {offsets = [0, 48], sizes = [8, 3], strides = [1, 1]} : vector<8x51xf32> to vector<8x3xf32>
    %cst_8 = arith.constant 2.000000e-02 : f32
    %14 = vector.broadcast %cst_8 : f32 to vector<8x3xf32>
    %15 = arith.mulf %13, %14 : vector<8x3xf32>
    %16 = arith.addf %8, %15 : vector<8x3xf32>
    %c0_9 = arith.constant 0 : index
    %c0_10 = arith.constant 0 : index
    %17 = vector.load %arg5[%c0_9, %c0_10] : memref<8x3xf32, #tpu.memory_space<vmem>>, vector<8x3xf32>
    tpu.vector_store %arg5[%c0_9, %c0_10], %16 {strides = array<i32>} : memref<8x3xf32, #tpu.memory_space<vmem>>, vector<8x3xf32>,
    return
  }
  func.func @transform_0(%arg0: i32) -> (i32, i32) {
    %c0_i32 = arith.constant 0 : i32
    %c0_i32_0 = arith.constant 0 : i32
    return %arg0, %c0_i32 : i32, i32
  }
  func.func @transform_1(%arg0: i32) -> (i32, i32) {
    %c0_i32 = arith.constant 0 : i32
    %c0_i32_0 = arith.constant 0 : i32
    return %arg0, %c0_i32 : i32, i32
  }
  func.func @transform_2(%arg0: i32) -> (i32, i32) {
    %c0_i32 = arith.constant 0 : i32
    %c0_i32_0 = arith.constant 0 : i32
    return %arg0, %c0_i32 : i32, i32
  }
  func.func @transform_3(%arg0: i32) -> (i32, i32) {
    %c0_i32 = arith.constant 0 : i32
    %c0_i32_0 = arith.constant 0 : i32
    return %arg0, %c0_i32 : i32, i32
  }
  func.func @transform_4(%arg0: i32) -> (i32, i32) {
    %c0_i32 = arith.constant 0 : i32
    %c0_i32_0 = arith.constant 0 : i32
    return %arg0, %c0_i32 : i32, i32
  }
}

</mosaic_0001>

<llo_original>
// kernel: tpu_custom_call.1
$region0: #{tpu_custom_call.1}
  #allocation0 [shape = 'u32[]', space=smem, size = 0x4, offset = 0x4, fixed_abs, tag = 'smem constant byte address 0x4 - core index']
  #allocation1 [shape = 'u32[144,128]{1,0:T(1,128)}', space=vmem, size = 0x12000, scoped, tag = 'internal scratch']
  %s0 = inlined_call_operand.vmem [shape: f32[8,48], index: 0, kind: input, shape index: {}]
  %s1 = inlined_call_operand.vmem [shape: f32[8,3], index: 1, kind: input, shape index: {}]
  %s2 = inlined_call_operand.vmem [shape: f32[8,51], index: 2, kind: input, shape index: {}]
  %s3 = inlined_call_operand.hbm [shape: f32[8,48], index: 3, kind: output, shape index: {0}]
  %s4 = inlined_call_operand.vmem [shape: f32[8,3], index: 4, kind: output, shape index: {1}]
  %5 = xla_tuple %s3, %s4
  %s6 = sld [smem:[#allocation0]]
  $region30: #{tpu_custom_call.1} parent=0
    _
  %s8 = ssub.s32 1, %s6
  %s9 = scalar_select 0, %s8, %s6
  $region1: #{tpu_custom_call.1} parent=0
    #allocation2 [shape = 'u8[4096]{0}', space=vmem, size = 0x1000, scoped, tag = 'output window, operand 0, single buffered']
    #allocation3 [shape = 's32[1]{0}', space=sflag, size = 0x4, scoped, tag = 'scoped memory for tpu_custom_call.1']
    %10 = vsyncpa [#allocation3], 0
    // Predicated region
    $region2: #{tpu_custom_call.1} parent=1 // pred_check
      _
    $region3: #{tpu_custom_call.1} parent=1 // pred_check_branch
      %12 = sbr.rel (0) target = $region5
    $region4: #{tpu_custom_call.1} parent=1 // pred_region
      _
    $region5: #{tpu_custom_call.1} parent=1 // pred_fallthru
      _
    // Predicated region
    $region6: #{tpu_custom_call.1} parent=1 // pred_check
      _
    $region7: #{tpu_custom_call.1} parent=1 // pred_check_branch
      %14 = sbr.rel (0) target = $region9
    $region8: #{tpu_custom_call.1} parent=1 // pred_region
      _
    $region9: #{tpu_custom_call.1} parent=1 // pred_fallthru
      _
    // Predicated region
    $region10: #{tpu_custom_call.1} parent=1 // pred_check
      _
    $region11: #{tpu_custom_call.1} parent=1 // pred_check_branch
      %16 = sbr.rel (0) target = $region13
    $region12: #{tpu_custom_call.1} parent=1 // pred_region
      _
    $region13: #{tpu_custom_call.1} parent=1 // pred_fallthru
      _
    %v17 = vlaneseq
    %v18 = vand.u32 %v17, 127
    %vm19 = vcmp.lt.s32.totalorder %v18, 3
    %v20 = vsel %vm19, 0.004, 0.2
    %v21 = vld [vmem:[%s2] sm:$0xff]
    %v22 = vld [vmem:[%s0] sm:$0xff]
    %v23 = vld [vmem:[%s1] sm:$0xff]
    %v24 = vmul.f32 %v21, %v20
    %v25 = vadd.f32 %v22, %v24
    %vm26 = vcmask 392192
    %27 = vst.msk [vmem:[#allocation2] sm:$0xff] %vm26, %v25
    %v28 = vmul.f32 %v21, 0.02
    %30 = vrot.lane.b32.xlu0 %v28, 80
    %v31 = vpop.permute.xlu0 %30
    %v33 = vadd.f32 %v23, %v31
    %vm34 = vcmask 23552
    %35 = vst.msk [vmem:[%s4] sm:$0xff] %vm34, %v33
    // Predicated region
    $region14: #{tpu_custom_call.1} parent=1 // pred_check
      _
    $region15: #{tpu_custom_call.1} parent=1 // pred_check_branch
      %37 = sbr.rel (0) target = $region17
    $region16: #{tpu_custom_call.1} parent=1 // pred_region
      %s39 = ssub.s32 128, 128
      %40 = vsyncadd [#allocation3], %s39
      %s42 = sshll.u32 [#allocation2], 4
      %s43 = int_to_ptr.vmem [resolvable:$true] %s42
      %45 = dma.vmem_to_hbm [thread:$0]  %s43, 128, %s3, [#allocation3]
    $region17: #{tpu_custom_call.1} parent=1 // pred_fallthru
      _
    // Predicated region
    $region18: #{tpu_custom_call.1} parent=1 // pred_check
      _
    $region19: #{tpu_custom_call.1} parent=1 // pred_check_branch
      %47 = sbr.rel (0) target = $region21
    $region20: #{tpu_custom_call.1} parent=1 // pred_region
      _
    $region21: #{tpu_custom_call.1} parent=1 // pred_fallthru
      _
    // Predicated region
    $region22: #{tpu_custom_call.1} parent=1 // pred_check
      _
    $region23: #{tpu_custom_call.1} parent=1 // pred_check_branch
      %49 = sbr.rel (0) target = $region25
    $region24: #{tpu_custom_call.1} parent=1 // pred_region
      %50 = dma.done [#allocation3], 128
    $region25: #{tpu_custom_call.1} parent=1 // pred_fallthru
      _
    // Predicated region
    $region26: #{tpu_custom_call.1} parent=1 // pred_check
      _
    $region27: #{tpu_custom_call.1} parent=1 // pred_check_branch
      %52 = sbr.rel (0) target = $region29
    $region28: #{tpu_custom_call.1} parent=1 // pred_region
      _
    $region29: #{tpu_custom_call.1} parent=1 // pred_fallthru
      _
    %53 = vsyncpa [#allocation3], 1

</llo_original>
